<compile_context>
chip_gen: v7x
topology: tpu7x:2x2x1
jax: 0.10.0
libtpu: 0.0.40
codegen_flags: <defaults>
</compile_context>

<pallas_src>
import math
from functools import partial

import jax
import jax.numpy as jnp
from jax.experimental import pallas as pl
from jax.experimental.pallas import tpu as pltpu


def _ray_encoder_kernel(
    x_ref,    # (B, C_in*L)          raw input, row-major flatten of (C_in, L)
    h0_ref,   # (B, H)               GRU initial hidden state
    w1_ref,   # (C_in*L, L2*16)      stride-8 subsample + conv1 folded (zero rows elsewhere)
    b1_ref,   # (1, L2*16)
    w2_ref,   # (L2*16, L2*32)       block-diagonal conv2
    b2_ref,   # (1, L2*32)
    wx_ref,   # (L2*32, 3H)          GRU input weights, columns r|z|n, flatten-permuted
    wh_ref,   # (H, 3H)              GRU hidden weights, columns r|z|n
    bg_ref,   # (2, 3H)              row 0 = b_ih, row 1 = b_hh
    wo_ref,   # (H, OUT_PAD)         [fc_mu | fc_logvar | I_H | 0-pad]
    bo_ref,   # (1, OUT_PAD)
    out_ref,  # (B, OUT_PAD)         [mu | logvar | h_new | 0-pad]
):
    H = h0_ref.shape[1]

    x = x_ref[...]

    # conv1 (kernel_size=1, stride 4) + the downstream stride-2 position
    # selection are baked into w1's zero rows -> one 2-D matmul + ReLU.
    h1 = jnp.maximum(
        jnp.dot(x, w1_ref[...], preferred_element_type=jnp.float32) + b1_ref[...], 0.0)

    # conv2 (kernel_size=1) as a block-diagonal matmul + ReLU.  `feat` comes out
    # already as the (position-major) flattened CNN output -> no in-kernel reshape.
    feat = jnp.maximum(
        jnp.dot(h1, w2_ref[...], preferred_element_type=jnp.float32) + b2_ref[...], 0.0)

    h0 = h0_ref[...]

    # Fused GRU gate matmuls (one K=L2*32 and one K=H contraction, 3H columns).
    gx = jnp.dot(feat, wx_ref[...], preferred_element_type=jnp.float32) + bg_ref[0:1, :]
    gh = jnp.dot(h0, wh_ref[...], preferred_element_type=jnp.float32) + bg_ref[1:2, :]

    r = jax.nn.sigmoid(gx[:, :H] + gh[:, :H])
    z = jax.nn.sigmoid(gx[:, H:2 * H] + gh[:, H:2 * H])
    n = jnp.tanh(gx[:, 2 * H:] + r * gh[:, 2 * H:])
    h = (1.0 - z) * n + z * h0                                     # (B, H)

    # Fused output heads + identity passthrough of h_new -> one lane-dense,
    # unmasked store of the whole [mu | logvar | h_new | pad] slab.
    out_ref[...] = (
        jnp.dot(h, wo_ref[...], preferred_element_type=jnp.float32) + bo_ref[...])


def init_params(key, c_in, latent_dim, hidden, n_flatten):
    """Deterministic synthetic parameters with PyTorch-equivalent shapes."""
    ks = jax.random.split(key, 10)
    f32 = jnp.float32
    return {
        # Conv1d weights with kernel_size=1, squeezed: (out_ch, in_ch)
        "conv1_w": 0.3 * jax.random.normal(ks[0], (16, c_in), dtype=f32),
        "conv1_b": 0.1 * jax.random.normal(ks[1], (16,), dtype=f32),
        "conv2_w": 0.3 * jax.random.normal(ks[2], (32, 16), dtype=f32),
        "conv2_b": 0.1 * jax.random.normal(ks[3], (32,), dtype=f32),
        # GRU (gate order r, z, n); biases 0 exactly like the module init
        "w_ih": (math.sqrt(2.0) / math.sqrt(n_flatten))
        * jax.random.normal(ks[4], (3 * hidden, n_flatten), dtype=f32),
        "w_hh": (math.sqrt(2.0) / math.sqrt(hidden))
        * jax.random.normal(ks[5], (3 * hidden, hidden), dtype=f32),
        "b_ih": jnp.zeros((3 * hidden,), dtype=f32),
        "b_hh": jnp.zeros((3 * hidden,), dtype=f32),
        # output heads
        "fc_mu_w": 0.2 * jax.random.normal(ks[6], (latent_dim, hidden), dtype=f32),
        "fc_mu_b": 0.1 * jax.random.normal(ks[7], (latent_dim,), dtype=f32),
        "fc_lv_w": 0.2 * jax.random.normal(ks[8], (latent_dim, hidden), dtype=f32),
        "fc_lv_b": 0.1 * jax.random.normal(ks[9], (latent_dim,), dtype=f32),
    }


def prepare_params(params, c_in, L):
    """One-time fusion of the PyTorch-layout parameters into the kernel layout.

    Run ONCE; outputs are reused on every forward call — no per-call
    reshape/transpose glue remains in the call path.
    """
    f32 = jnp.float32
    H = params["w_hh"].shape[1]
    latent = params["fc_mu_w"].shape[0]
    L1 = (L - 1) // 4 + 1          # Conv1d(k=1, stride=4) output length
    L2 = (L1 - 1) // 2 + 1         # Conv1d(k=1, stride=2) output length
    n_flatten = 32 * L2

    # --- stride-8 subsample + conv1 folded into one (C*L, L2*16) matrix -------
    # x.reshape(B, C*L)[b, c*L + pos]; only pos == 8*p contributes, mapping to
    # output column p*16 + f with weight conv1_w[f, c].
    w1 = jnp.zeros((c_in, L, L2, 16), dtype=f32)
    for p in range(L2):
        w1 = w1.at[:, 8 * p, p, :].set(params["conv1_w"].T)        # (C, 16)
    w1 = w1.reshape(c_in * L, L2 * 16)
    b1 = jnp.tile(params["conv1_b"], (L2,)).reshape(1, L2 * 16)

    # --- conv2 as block-diagonal (L2*16, L2*32) -------------------------------
    w2 = jnp.zeros((L2, 16, L2, 32), dtype=f32)
    for p in range(L2):
        w2 = w2.at[p, :, p, :].set(params["conv2_w"].T)            # (16, 32)
    w2 = w2.reshape(L2 * 16, L2 * 32)
    b2 = jnp.tile(params["conv2_b"], (L2,)).reshape(1, L2 * 32)

    # --- GRU: fuse the 3 gate matmuls; re-permute columns from PyTorch's
    #     channel-major flatten (g*L2 + p) to our position-major feat (p*32 + g).
    w_ih_pm = (params["w_ih"].reshape(3 * H, 32, L2)
               .transpose(0, 2, 1).reshape(3 * H, n_flatten))
    wx = w_ih_pm.T                                                 # (n_flatten, 3H)
    wh = params["w_hh"].T                                          # (H, 3H)
    bg = jnp.stack([params["b_ih"], params["b_hh"]], axis=0)       # (2, 3H)

    # --- output heads fused with an identity block (passes h_new through the
    #     same matmul) and padded to a lane-dense width (multiple of 128) ------
    out_valid = 2 * latent + H
    out_pad = ((out_valid + 127) // 128) * 128
    wo = jnp.concatenate(
        [params["fc_mu_w"].T,                       # (H, latent)
         params["fc_lv_w"].T,                       # (H, latent)
         jnp.eye(H, dtype=f32),                     # (H, H)  -> h_new passthrough
         jnp.zeros((H, out_pad - out_valid), f32)], axis=1)        # (H, out_pad)
    bo = jnp.concatenate(
        [params["fc_mu_b"], params["fc_lv_b"],
         jnp.zeros((H,), f32), jnp.zeros((out_pad - out_valid,), f32)]).reshape(1, out_pad)

    return {"w1": w1, "b1": b1, "w2": w2, "b2": b2,
            "wx": wx, "wh": wh, "bg": bg, "wo": wo, "bo": bo}


@partial(jax.jit, static_argnames=("latent_dim",))
def ray_encoder_forward(x, time_sequence, prep, *, latent_dim):
    """Pallas implementation of RayEncoder.forward with sequence_length == 1."""
    # TODO(synk): sequence_length > 1 (multi-step GRU unroll) path not implemented.
    B = x.shape[0]
    H = prep["wh"].shape[0]
    out_pad = prep["bo"].shape[1]

    x2d = x.reshape(B, -1)                     # (B, C*L)        free bitcast
    h0 = time_sequence.reshape(B, H)           # (1,B,H)->(B,H)  free bitcast

    inputs = (x2d, h0,
              prep["w1"], prep["b1"], prep["w2"], prep["b2"],
              prep["wx"], prep["wh"], prep["bg"], prep["wo"], prep["bo"])

    vmem = pl.BlockSpec(memory_space=pltpu.MemorySpace.VMEM)
    out = pl.pallas_call(
        _ray_encoder_kernel,
        out_shape=jax.ShapeDtypeStruct((B, out_pad), jnp.float32),
        in_specs=[vmem] * len(inputs),
        out_specs=vmem,
    )(*inputs)

    mu = out[:, :latent_dim]
    logvar = out[:, latent_dim:2 * latent_dim]
    recurrent_hidden = out[:, 2 * latent_dim:2 * latent_dim + H][None]   # (1, B, H)
    return mu, logvar, recurrent_hidden


def _reference_forward(x, time_sequence, params):
    """Pure-JAX reference that mirrors the PyTorch forward literally (f32 precision)."""
    hp = jax.lax.Precision.HIGHEST
    B, C, L = x.shape
    H = params["w_hh"].shape[1]
    x1 = x[:, :, ::4]
    h1 = jnp.maximum(
        jnp.einsum("fc,bcl->bfl", params["conv1_w"], x1, precision=hp)
        + params["conv1_b"][None, :, None], 0.0)
    h1 = h1[:, :, ::2]
    h2 = jnp.maximum(
        jnp.einsum("gf,bfl->bgl", params["conv2_w"], h1, precision=hp)
        + params["conv2_b"][None, :, None], 0.0)
    feat = h2.reshape(B, -1)                       # channel-major flatten (nn.Flatten)
    h0 = time_sequence.reshape(B, H)
    gx = jnp.dot(feat, params["w_ih"].T, precision=hp) + params["b_ih"]
    gh = jnp.dot(h0, params["w_hh"].T, precision=hp) + params["b_hh"]
    r = jax.nn.sigmoid(gx[:, :H] + gh[:, :H])
    z = jax.nn.sigmoid(gx[:, H:2 * H] + gh[:, H:2 * H])
    n = jnp.tanh(gx[:, 2 * H:] + r * gh[:, 2 * H:])
    h = (1.0 - z) * n + z * h0
    mu = jnp.dot(h, params["fc_mu_w"].T, precision=hp) + params["fc_mu_b"]
    lv = jnp.dot(h, params["fc_lv_w"].T, precision=hp) + params["fc_lv_b"]
    return mu, lv, h[None]


if __name__ == "__main__":
    key = jax.random.PRNGKey(0)
    k_x, k_h, k_p = jax.random.split(key, 3)

    # small shapes: batch=4, inputchannel=4, ray length=64, latent=8, recurrent=32
    B, C_in, L = 4, 4, 64
    latent_dim, hidden = 8, 32
    L1 = (L - 1) // 4 + 1
    L2 = (L1 - 1) // 2 + 1
    n_flatten = 32 * L2  # 256

    params = init_params(k_p, C_in, latent_dim, hidden, n_flatten)
    prep = prepare_params(params, C_in, L)       # one-time weight fusion (hoisted)

    x = jax.random.normal(k_x, (B, C_in, L), dtype=jnp.float32)
    time_sequence = 0.1 * jax.random.normal(k_h, (1, B, hidden), dtype=jnp.float32)

    mu, logvar, rec_h = ray_encoder_forward(x, time_sequence, prep, latent_dim=latent_dim)
    jax.block_until_ready((mu, logvar, rec_h))

    mu_ref, lv_ref, h_ref = _reference_forward(x, time_sequence, params)
    assert jnp.allclose(mu, mu_ref, rtol=1e-4, atol=1e-4)
    assert jnp.allclose(logvar, lv_ref, rtol=1e-4, atol=1e-4)
    assert jnp.allclose(rec_h, h_ref, rtol=1e-4, atol=1e-4)

    print("KERNEL_OK")
</pallas_src>

<mosaic_0001>
module attributes {stable_mosaic.version = 11 : i64} {
  func.func @_ray_encoder_kernel(%arg0: memref<4x256xf32, #tpu.memory_space<vmem>>, %arg1: memref<4x32xf32, #tpu.memory_space<vmem>>, %arg2: memref<256x128xf32, #tpu.memory_space<vmem>>, %arg3: memref<1x128xf32, #tpu.memory_space<vmem>>, %arg4: memref<128x256xf32, #tpu.memory_space<vmem>>, %arg5: memref<1x256xf32, #tpu.memory_space<vmem>>, %arg6: memref<256x96xf32, #tpu.memory_space<vmem>>, %arg7: memref<32x96xf32, #tpu.memory_space<vmem>>, %arg8: memref<2x96xf32, #tpu.memory_space<vmem>>, %arg9: memref<32x128xf32, #tpu.memory_space<vmem>>, %arg10: memref<1x128xf32, #tpu.memory_space<vmem>>, %arg11: memref<4x128xf32, #tpu.memory_space<vmem>>) attributes {dimension_semantics = [], scalar_prefetch = 0 : i64, scratch_operands = 0 : i64, tpu.core_type = #tpu.core_type<tc>} {
    %c0 = arith.constant 0 : index
    %c0_0 = arith.constant 0 : index
    %0 = vector.load %arg0[%c0, %c0_0] : memref<4x256xf32, #tpu.memory_space<vmem>>, vector<4x256xf32>
    %c0_1 = arith.constant 0 : index
    %c0_2 = arith.constant 0 : index
    %1 = vector.load %arg2[%c0_1, %c0_2] : memref<256x128xf32, #tpu.memory_space<vmem>>, vector<256x128xf32>
    %cst = arith.constant dense<0.000000e+00> : vector<4x128xf32>
    %2 = tpu.matmul %0, %1, %cst {dimension_numbers = #tpu.dot_dimension_numbers<[1], [0], [0], [1], [0, 0, 1, 1], [], []>} : vector<4x256xf32>, vector<256x128xf32>, vector<4x128xf32> -> vector<4x128xf32>
    %c0_3 = arith.constant 0 : index
    %c0_4 = arith.constant 0 : index
    %3 = vector.load %arg3[%c0_3, %c0_4] : memref<1x128xf32, #tpu.memory_space<vmem>>, vector<1x128xf32>
    %4 = vector.broadcast %3 : vector<1x128xf32> to vector<4x128xf32>
    %5 = arith.addf %2, %4 : vector<4x128xf32>
    %cst_5 = arith.constant 0.000000e+00 : f32
    %6 = vector.broadcast %cst_5 : f32 to vector<4x128xf32>
    %7 = arith.maximumf %5, %6 : vector<4x128xf32>
    %c0_6 = arith.constant 0 : index
    %c0_7 = arith.constant 0 : index
    %8 = vector.load %arg4[%c0_6, %c0_7] : memref<128x256xf32, #tpu.memory_space<vmem>>, vector<128x256xf32>
    %cst_8 = arith.constant dense<0.000000e+00> : vector<4x256xf32>
    %9 = tpu.matmul %7, %8, %cst_8 {dimension_numbers = #tpu.dot_dimension_numbers<[1], [0], [0], [1], [0, 0, 1, 1], [], []>} : vector<4x128xf32>, vector<128x256xf32>, vector<4x256xf32> -> vector<4x256xf32>
    %c0_9 = arith.constant 0 : index
    %c0_10 = arith.constant 0 : index
    %10 = vector.load %arg5[%c0_9, %c0_10] : memref<1x256xf32, #tpu.memory_space<vmem>>, vector<1x256xf32>
    %11 = vector.broadcast %10 : vector<1x256xf32> to vector<4x256xf32>
    %12 = arith.addf %9, %11 : vector<4x256xf32>
    %cst_11 = arith.constant 0.000000e+00 : f32
    %13 = vector.broadcast %cst_11 : f32 to vector<4x256xf32>
    %14 = arith.maximumf %12, %13 : vector<4x256xf32>
    %c0_12 = arith.constant 0 : index
    %c0_13 = arith.constant 0 : index
    %15 = vector.load %arg1[%c0_12, %c0_13] : memref<4x32xf32, #tpu.memory_space<vmem>>, vector<4x32xf32>
    %c0_14 = arith.constant 0 : index
    %c0_15 = arith.constant 0 : index
    %16 = vector.load %arg6[%c0_14, %c0_15] : memref<256x96xf32, #tpu.memory_space<vmem>>, vector<256x96xf32>
    %cst_16 = arith.constant dense<0.000000e+00> : vector<4x96xf32>
    %17 = tpu.matmul %14, %16, %cst_16 {dimension_numbers = #tpu.dot_dimension_numbers<[1], [0], [0], [1], [0, 0, 1, 1], [], []>} : vector<4x256xf32>, vector<256x96xf32>, vector<4x96xf32> -> vector<4x96xf32>
    %c0_17 = arith.constant 0 : index
    %c0_18 = arith.constant 0 : index
    %18 = vector.load %arg8[%c0_17, %c0_18] : memref<2x96xf32, #tpu.memory_space<vmem>>, vector<1x96xf32>
    %19 = vector.broadcast %18 : vector<1x96xf32> to vector<4x96xf32>
    %20 = arith.addf %17, %19 : vector<4x96xf32>
    %c0_19 = arith.constant 0 : index
    %c0_20 = arith.constant 0 : index
    %21 = vector.load %arg7[%c0_19, %c0_20] : memref<32x96xf32, #tpu.memory_space<vmem>>, vector<32x96xf32>
    %cst_21 = arith.constant dense<0.000000e+00> : vector<4x96xf32>
    %22 = tpu.matmul %15, %21, %cst_21 {dimension_numbers = #tpu.dot_dimension_numbers<[1], [0], [0], [1], [0, 0, 1, 1], [], []>} : vector<4x32xf32>, vector<32x96xf32>, vector<4x96xf32> -> vector<4x96xf32>
    %c1 = arith.constant 1 : index
    %c0_22 = arith.constant 0 : index
    %23 = vector.load %arg8[%c1, %c0_22] : memref<2x96xf32, #tpu.memory_space<vmem>>, vector<1x96xf32>
    %24 = vector.broadcast %23 : vector<1x96xf32> to vector<4x96xf32>
    %25 = arith.addf %22, %24 : vector<4x96xf32>
    %26 = vector.extract_strided_slice %20 {offsets = [0, 0], sizes = [4, 32], strides = [1, 1]} : vector<4x96xf32> to vector<4x32xf32>
    %27 = vector.extract_strided_slice %25 {offsets = [0, 0], sizes = [4, 32], strides = [1, 1]} : vector<4x96xf32> to vector<4x32xf32>
    %28 = arith.addf %26, %27 : vector<4x32xf32>
    %29 = arith.negf %28 : vector<4x32xf32>
    %30 = math.exp %29 : vector<4x32xf32>
    %cst_23 = arith.constant 1.000000e+00 : f32
    %31 = vector.broadcast %cst_23 : f32 to vector<4x32xf32>
    %32 = arith.addf %31, %30 : vector<4x32xf32>
    %33 = arith.divf %31, %32 : vector<4x32xf32>
    %34 = vector.extract_strided_slice %20 {offsets = [0, 32], sizes = [4, 32], strides = [1, 1]} : vector<4x96xf32> to vector<4x32xf32>
    %35 = vector.extract_strided_slice %25 {offsets = [0, 32], sizes = [4, 32], strides = [1, 1]} : vector<4x96xf32> to vector<4x32xf32>
    %36 = arith.addf %34, %35 : vector<4x32xf32>
    %37 = arith.negf %36 : vector<4x32xf32>
    %38 = math.exp %37 : vector<4x32xf32>
    %cst_24 = arith.constant 1.000000e+00 : f32
    %39 = vector.broadcast %cst_24 : f32 to vector<4x32xf32>
    %40 = arith.addf %39, %38 : vector<4x32xf32>
    %41 = arith.divf %39, %40 : vector<4x32xf32>
    %42 = vector.extract_strided_slice %20 {offsets = [0, 64], sizes = [4, 32], strides = [1, 1]} : vector<4x96xf32> to vector<4x32xf32>
    %43 = vector.extract_strided_slice %25 {offsets = [0, 64], sizes = [4, 32], strides = [1, 1]} : vector<4x96xf32> to vector<4x32xf32>
    %44 = arith.mulf %33, %43 : vector<4x32xf32>
    %45 = arith.addf %42, %44 : vector<4x32xf32>
    %46 = math.tanh %45 : vector<4x32xf32>
    %cst_25 = arith.constant 1.000000e+00 : f32
    %47 = vector.broadcast %cst_25 : f32 to vector<4x32xf32>
    %48 = arith.subf %47, %41 : vector<4x32xf32>
    %49 = arith.mulf %48, %46 : vector<4x32xf32>
    %50 = arith.mulf %41, %15 : vector<4x32xf32>
    %51 = arith.addf %49, %50 : vector<4x32xf32>
    %c0_26 = arith.constant 0 : index
    %c0_27 = arith.constant 0 : index
    %52 = vector.load %arg9[%c0_26, %c0_27] : memref<32x128xf32, #tpu.memory_space<vmem>>, vector<32x128xf32>
    %cst_28 = arith.constant dense<0.000000e+00> : vector<4x128xf32>
    %53 = tpu.matmul %51, %52, %cst_28 {dimension_numbers = #tpu.dot_dimension_numbers<[1], [0], [0], [1], [0, 0, 1, 1], [], []>} : vector<4x32xf32>, vector<32x128xf32>, vector<4x128xf32> -> vector<4x128xf32>
    %c0_29 = arith.constant 0 : index
    %c0_30 = arith.constant 0 : index
    %54 = vector.load %arg10[%c0_29, %c0_30] : memref<1x128xf32, #tpu.memory_space<vmem>>, vector<1x128xf32>
    %55 = vector.broadcast %54 : vector<1x128xf32> to vector<4x128xf32>
    %56 = arith.addf %53, %55 : vector<4x128xf32>
    %c0_31 = arith.constant 0 : index
    %c0_32 = arith.constant 0 : index
    %57 = vector.load %arg11[%c0_31, %c0_32] : memref<4x128xf32, #tpu.memory_space<vmem>>, vector<4x128xf32>
    tpu.vector_store %arg11[%c0_31, %c0_32], %56 {strides = array<i32>} : memref<4x128xf32, #tpu.memory_space<vmem>>, vector<4x128xf32>,
    return
  }
}

</mosaic_0001>

<llo_original>
// kernel: ray_encoder_forward.1
$region0: #{ray_encoder_forward.1}
  #allocation0 [shape = 'u32[]', space=smem, size = 0x4, offset = 0x4, fixed_abs, tag = 'smem constant byte address 0x4 - core index']
  #allocation1 [shape = 'u32[144,128]{1,0:T(1,128)}', space=vmem, size = 0x12000, scoped, tag = 'internal scratch']
  %s0 = inlined_call_operand.vmem [shape: f32[4,256], index: 0, kind: input, shape index: {}]
  %s1 = inlined_call_operand.vmem [shape: f32[4,32], index: 1, kind: input, shape index: {}]
  %s2 = inlined_call_operand.vmem [shape: f32[256,128], index: 2, kind: input, shape index: {}]
  %s3 = inlined_call_operand.vmem [shape: f32[1,128], index: 3, kind: input, shape index: {}]
  %s4 = inlined_call_operand.hbm [shape: f32[128,256], index: 4, kind: input, shape index: {}]
  %s5 = inlined_call_operand.vmem [shape: f32[1,256], index: 5, kind: input, shape index: {}]
  %s6 = inlined_call_operand.vmem [shape: f32[256,96], index: 6, kind: input, shape index: {}]
  %s7 = inlined_call_operand.vmem [shape: f32[32,96], index: 7, kind: input, shape index: {}]
  %s8 = inlined_call_operand.vmem [shape: f32[2,96], index: 8, kind: input, shape index: {}]
  %s9 = inlined_call_operand.vmem [shape: f32[32,128], index: 9, kind: input, shape index: {}]
  %s10 = inlined_call_operand.vmem [shape: f32[1,128], index: 10, kind: input, shape index: {}]
  %s11 = inlined_call_operand.vmem [shape: f32[4,128], index: 11, kind: output, shape index: {}]
  %s12 = sld [smem:[#allocation0]]
  $region58: #{ray_encoder_forward.1} parent=0
    _
  %s14 = ssub.s32 1, %s12
  %s15 = scalar_select 0, %s14, %s12
  $region1: #{ray_encoder_forward.1} parent=0
    #allocation2 [shape = 'u8[131072]{0}', space=vmem, size = 0x20000, scoped, tag = 'input window, operand 4, single buffered']
    #allocation3 [shape = 's32[1]{0}', space=sflag, size = 0x4, scoped, tag = 'scoped memory for ray_encoder_forward.1']
    %16 = vsyncpa [#allocation3], 0
    // Predicated region
    $region2: #{ray_encoder_forward.1} parent=1 // pred_check
      _
    $region3: #{ray_encoder_forward.1} parent=1 // pred_check_branch
      %18 = sbr.rel (0) target = $region5
    $region4: #{ray_encoder_forward.1} parent=1 // pred_region
      _
    $region5: #{ray_encoder_forward.1} parent=1 // pred_fallthru
      _
    // Predicated region
    $region6: #{ray_encoder_forward.1} parent=1 // pred_check
      _
    $region7: #{ray_encoder_forward.1} parent=1 // pred_check_branch
      %20 = sbr.rel (0) target = $region9
    $region8: #{ray_encoder_forward.1} parent=1 // pred_region
      _
    $region9: #{ray_encoder_forward.1} parent=1 // pred_fallthru
      _
    // Predicated region
    $region10: #{ray_encoder_forward.1} parent=1 // pred_check
      _
    $region11: #{ray_encoder_forward.1} parent=1 // pred_check_branch
      %22 = sbr.rel (0) target = $region13
    $region12: #{ray_encoder_forward.1} parent=1 // pred_region
      _
    $region13: #{ray_encoder_forward.1} parent=1 // pred_fallthru
      _
    // Predicated region
    $region14: #{ray_encoder_forward.1} parent=1 // pred_check
      _
    $region15: #{ray_encoder_forward.1} parent=1 // pred_check_branch
      %24 = sbr.rel (0) target = $region17
    $region16: #{ray_encoder_forward.1} parent=1 // pred_region
      _
    $region17: #{ray_encoder_forward.1} parent=1 // pred_fallthru
      _
    // Predicated region
    $region18: #{ray_encoder_forward.1} parent=1 // pred_check
      _
    $region19: #{ray_encoder_forward.1} parent=1 // pred_check_branch
      %26 = sbr.rel (0) target = $region21
    $region20: #{ray_encoder_forward.1} parent=1 // pred_region
      %s28 = ssub.s32 4096, 4096
      %29 = vsyncadd [#allocation3], %s28
      %s30 = sshll.u32 [#allocation2], 4
      %s31 = int_to_ptr.vmem [resolvable:$true] %s30
      %36 = dma.hbm_to_vmem [thread:$0]  %s4, 4096, %s31, [#allocation3], 256, 256, 16
    $region21: #{ray_encoder_forward.1} parent=1 // pred_fallthru
      _
    // Predicated region
    $region22: #{ray_encoder_forward.1} parent=1 // pred_check
      _
    $region23: #{ray_encoder_forward.1} parent=1 // pred_check_branch
      %38 = sbr.rel (0) target = $region25
    $region24: #{ray_encoder_forward.1} parent=1 // pred_region
      _
    $region25: #{ray_encoder_forward.1} parent=1 // pred_fallthru
      _
    // Predicated region
    $region26: #{ray_encoder_forward.1} parent=1 // pred_check
      _
    $region27: #{ray_encoder_forward.1} parent=1 // pred_check_branch
      %40 = sbr.rel (0) target = $region29
    $region28: #{ray_encoder_forward.1} parent=1 // pred_region
      _
    $region29: #{ray_encoder_forward.1} parent=1 // pred_fallthru
      _
    // Predicated region
    $region30: #{ray_encoder_forward.1} parent=1 // pred_check
      _
    $region31: #{ray_encoder_forward.1} parent=1 // pred_check_branch
      %42 = sbr.rel (0) target = $region33
    $region32: #{ray_encoder_forward.1} parent=1 // pred_region
      _
    $region33: #{ray_encoder_forward.1} parent=1 // pred_fallthru
      _
    // Predicated region
    $region34: #{ray_encoder_forward.1} parent=1 // pred_check
      _
    $region35: #{ray_encoder_forward.1} parent=1 // pred_check_branch
      %44 = sbr.rel (0) target = $region37
    $region36: #{ray_encoder_forward.1} parent=1 // pred_region
      _
    $region37: #{ray_encoder_forward.1} parent=1 // pred_fallthru
      _
    // Predicated region
    $region38: #{ray_encoder_forward.1} parent=1 // pred_check
      _
    $region39: #{ray_encoder_forward.1} parent=1 // pred_check_branch
      %46 = sbr.rel (0) target = $region41
    $region40: #{ray_encoder_forward.1} parent=1 // pred_region
      _
    $region41: #{ray_encoder_forward.1} parent=1 // pred_fallthru
      _
    // Predicated region
    $region42: #{ray_encoder_forward.1} parent=1 // pred_check
      _
    $region43: #{ray_encoder_forward.1} parent=1 // pred_check_branch
      %48 = sbr.rel (0) target = $region45
    $region44: #{ray_encoder_forward.1} parent=1 // pred_region
      _
    $region45: #{ray_encoder_forward.1} parent=1 // pred_fallthru
      _
    // Predicated region
    $region46: #{ray_encoder_forward.1} parent=1 // pred_check
      _
    $region47: #{ray_encoder_forward.1} parent=1 // pred_check_branch
      %50 = sbr.rel (0) target = $region49
    $region48: #{ray_encoder_forward.1} parent=1 // pred_region
      %51 = dma.done [#allocation3], 4096
    $region49: #{ray_encoder_forward.1} parent=1 // pred_fallthru
      _
    %v52 = vld [vmem:[%s0] sm:$0xff]
    %v53 = vld [vmem:[%s2] sm:$0xff]
    %v54 = vld [vmem:[%s2 + $0x8] sm:$0xff]
    %v55 = vld [vmem:[%s2 + $0x10] sm:$0xff]
    %v56 = vld [vmem:[%s2 + $0x18] sm:$0xff]
    %v57 = vld [vmem:[%s2 + $0x20] sm:$0xff]
    %v58 = vld [vmem:[%s2 + $0x28] sm:$0xff]
    %v59 = vld [vmem:[%s2 + $0x30] sm:$0xff]
    %v60 = vld [vmem:[%s2 + $0x38] sm:$0xff]
    %v61 = vld [vmem:[%s2 + $0x40] sm:$0xff]
    %v62 = vld [vmem:[%s2 + $0x48] sm:$0xff]
    %v63 = vld [vmem:[%s2 + $0x50] sm:$0xff]
    %v64 = vld [vmem:[%s2 + $0x58] sm:$0xff]
    %v65 = vld [vmem:[%s2 + $0x60] sm:$0xff]
    %v66 = vld [vmem:[%s2 + $0x68] sm:$0xff]
    %v67 = vld [vmem:[%s2 + $0x70] sm:$0xff]
    %v68 = vld [vmem:[%s2 + $0x78] sm:$0xff]
    %v69 = vld [vmem:[%s2 + $0x80] sm:$0xff]
    %v70 = vld [vmem:[%s2 + $0x88] sm:$0xff]
    %v71 = vld [vmem:[%s2 + $0x90] sm:$0xff]
    %v72 = vld [vmem:[%s2 + $0x98] sm:$0xff]
    %v73 = vld [vmem:[%s2 + $0xa0] sm:$0xff]
    %v74 = vld [vmem:[%s2 + $0xa8] sm:$0xff]
    %v75 = vld [vmem:[%s2 + $0xb0] sm:$0xff]
    %v76 = vld [vmem:[%s2 + $0xb8] sm:$0xff]
    %v77 = vld [vmem:[%s2 + $0xc0] sm:$0xff]
    %v78 = vld [vmem:[%s2 + $0xc8] sm:$0xff]
    %v79 = vld [vmem:[%s2 + $0xd0] sm:$0xff]
    %v80 = vld [vmem:[%s2 + $0xd8] sm:$0xff]
    %v81 = vld [vmem:[%s2 + $0xe0] sm:$0xff]
    %v82 = vld [vmem:[%s2 + $0xe8] sm:$0xff]
    %v83 = vld [vmem:[%s2 + $0xf0] sm:$0xff]
    %v84 = vld [vmem:[%s2 + $0xf8] sm:$0xff]
    %v85 = vld [vmem:[%s3] sm:$0x1]
    %v87 = vlaneseq
    %v88 = vshrl.u32 %v87, 7
    %v89 = vsub.s32 0, %v88
    %v90 = vrot.slane %v85, %v89
    %v93 = vcombine.high %v52, %v52
    %95 = vmatprep.subr.mxu0 0.0
    %96 = vmatpush1.msra.mxu0 %v53
    %97 = vmatprep.subr.mxu0 0.0
    %98 = vmatpush1.msra.mxu0 %v54
    %99 = vmatprep.subr.mxu0 0.0
    %100 = vmatpush1.msra.mxu0 %v55
    %101 = vmatprep.subr.mxu0 0.0
    %102 = vmatpush1.msra.mxu0 %v56
    %103 = vmatprep.subr.mxu0 0.0
    %104 = vmatpush1.msra.mxu0 %v57
    %105 = vmatprep.subr.mxu0 0.0
    %106 = vmatpush1.msra.mxu0 %v58
    %107 = vmatprep.subr.mxu0 0.0
    %108 = vmatpush1.msra.mxu0 %v59
    %109 = vmatprep.subr.mxu0 0.0
    %110 = vmatpush1.msra.mxu0 %v60
    %111 = vmatprep.subr.mxu0 0.0
    %112 = vmatpush1.msra.mxu0 %v61
    %113 = vmatprep.subr.mxu0 0.0
    %114 = vmatpush1.msra.mxu0 %v62
    %115 = vmatprep.subr.mxu0 0.0
    %116 = vmatpush1.msra.mxu0 %v63
    %117 = vmatprep.subr.mxu0 0.0
    %118 = vmatpush1.msra.mxu0 %v64
    %119 = vmatprep.subr.mxu0 0.0
    %120 = vmatpush1.msra.mxu0 %v65
    %121 = vmatprep.subr.mxu0 0.0
    %122 = vmatpush1.msra.mxu0 %v66
    %123 = vmatprep.subr.mxu0 0.0
    %124 = vmatpush1.msra.mxu0 %v67
    %125 = vmatprep.subr.mxu0 0.0
    %126 = vmatpush1.msra.mxu0 %v68
    %127 = vmatprep.subr.mxu0 0.0
    %128 = vmatpush1.msra.mxu0 %v69
    %129 = vmatprep.subr.mxu0 0.0
    %130 = vmatpush1.msra.mxu0 %v70
    %131 = vmatprep.subr.mxu0 0.0
    %132 = vmatpush1.msra.mxu0 %v71
    %133 = vmatprep.subr.mxu0 0.0
    %134 = vmatpush1.msra.mxu0 %v72
    %135 = vmatprep.subr.mxu0 0.0
    %136 = vmatpush1.msra.mxu0 %v73
    %137 = vmatprep.subr.mxu0 0.0
    %138 = vmatpush1.msra.mxu0 %v74
    %139 = vmatprep.subr.mxu0 0.0
    %140 = vmatpush1.msra.mxu0 %v75
    %141 = vmatprep.subr.mxu0 0.0
    %142 = vmatpush1.msra.mxu0 %v76
    %143 = vmatprep.subr.mxu0 0.0
    %144 = vmatpush1.msra.mxu0 %v77
    %145 = vmatprep.subr.mxu0 0.0
    %146 = vmatpush1.msra.mxu0 %v78
    %147 = vmatprep.subr.mxu0 0.0
    %148 = vmatpush1.msra.mxu0 %v79
    %149 = vmatprep.subr.mxu0 0.0
    %150 = vmatpush1.msra.mxu0 %v80
    %151 = vmatprep.subr.mxu0 0.0
    %152 = vmatpush1.msra.mxu0 %v81
    %153 = vmatprep.subr.mxu0 0.0
    %154 = vmatpush1.msra.mxu0 %v82
    %155 = vmatprep.subr.mxu0 0.0
    %156 = vmatpush1.msra.mxu0 %v83
    %157 = vmatprep.subr.mxu0 0.0
    %158 = vmatpush1.msra.mxu0 %v84
    %159 = vmatprep.mubr.f32.mxu0 %v93
    %160 = vmatmul.mubr.f32.gmra.mrb[0].mxu0 %v52
    %v161 = vpop.f32.mrb[0].mxu0
    %v162 = vadd.f32 %v90, %v161
    %v163 = vpop.f32.mrb[0].mxu0
    %164 = vdwg.mxu0
    %v165 = vmax.f32 %v162, 0.0
    %v166 = vld [vmem:[#allocation2] sm:$0xff]
    %v167 = vld [vmem:[#allocation2 + $0x8] sm:$0xff]
    %v168 = vld [vmem:[#allocation2 + $0x10] sm:$0xff]
    %v169 = vld [vmem:[#allocation2 + $0x18] sm:$0xff]
    %v170 = vld [vmem:[#allocation2 + $0x20] sm:$0xff]
    %v171 = vld [vmem:[#allocation2 + $0x28] sm:$0xff]
    %v172 = vld [vmem:[#allocation2 + $0x30] sm:$0xff]
    %v173 = vld [vmem:[#allocation2 + $0x38] sm:$0xff]
    %v174 = vld [vmem:[#allocation2 + $0x40] sm:$0xff]
    %v175 = vld [vmem:[#allocation2 + $0x48] sm:$0xff]
    %v176 = vld [vmem:[#allocation2 + $0x50] sm:$0xff]
    %v177 = vld [vmem:[#allocation2 + $0x58] sm:$0xff]
    %v178 = vld [vmem:[#allocation2 + $0x60] sm:$0xff]
    %v179 = vld [vmem:[#allocation2 + $0x68] sm:$0xff]
    %v180 = vld [vmem:[#allocation2 + $0x70] sm:$0xff]
    %v181 = vld [vmem:[#allocation2 + $0x78] sm:$0xff]
    %v182 = vld [vmem:[#allocation2 + $0x80] sm:$0xff]
    %v183 = vld [vmem:[#allocation2 + $0x88] sm:$0xff]
    %v184 = vld [vmem:[#allocation2 + $0x90] sm:$0xff]
    %v185 = vld [vmem:[#allocation2 + $0x98] sm:$0xff]
    %v186 = vld [vmem:[#allocation2 + $0xa0] sm:$0xff]
    %v187 = vld [vmem:[#allocation2 + $0xa8] sm:$0xff]
    %v188 = vld [vmem:[#allocation2 + $0xb0] sm:$0xff]
    %v189 = vld [vmem:[#allocation2 + $0xb8] sm:$0xff]
    %v190 = vld [vmem:[#allocation2 + $0xc0] sm:$0xff]
    %v191 = vld [vmem:[#allocation2 + $0xc8] sm:$0xff]
    %v192 = vld [vmem:[#allocation2 + $0xd0] sm:$0xff]
    %v193 = vld [vmem:[#allocation2 + $0xd8] sm:$0xff]
    %v194 = vld [vmem:[#allocation2 + $0xe0] sm:$0xff]
    %v195 = vld [vmem:[#allocation2 + $0xe8] sm:$0xff]
    %v196 = vld [vmem:[#allocation2 + $0xf0] sm:$0xff]
    %v197 = vld [vmem:[#allocation2 + $0xf8] sm:$0xff]
    %v198 = vld [vmem:[%s5] sm:$0x3]
    %v200 = vlaneseq
    %v201 = vshrl.u32 %v200, 7
    %v202 = vsub.s32 0, %v201
    %v203 = vrot.slane %v198, %v202
    %v204 = vlaneseq
    %v205 = vshrl.u32 %v204, 7
    %v206 = vsub.s32 1, %v205
    %v207 = vrot.slane %v198, %v206
    %210 = vmatprep.subr.mxu0 %v167
    %211 = vmatpush1.msra.mxu0 %v166
    %212 = vmatprep.subr.mxu0 %v169
    %213 = vmatpush1.msra.mxu0 %v168
    %214 = vmatprep.subr.mxu0 %v171
    %215 = vmatpush1.msra.mxu0 %v170
    %216 = vmatprep.subr.mxu0 %v173
    %217 = vmatpush1.msra.mxu0 %v172
    %218 = vmatprep.subr.mxu0 %v175
    %219 = vmatpush1.msra.mxu0 %v174
    %220 = vmatprep.subr.mxu0 %v177
    %221 = vmatpush1.msra.mxu0 %v176
    %222 = vmatprep.subr.mxu0 %v179
    %223 = vmatpush1.msra.mxu0 %v178
    %224 = vmatprep.subr.mxu0 %v181
    %225 = vmatpush1.msra.mxu0 %v180
    %226 = vmatprep.subr.mxu0 %v183
    %227 = vmatpush1.msra.mxu0 %v182
    %228 = vmatprep.subr.mxu0 %v185
    %229 = vmatpush1.msra.mxu0 %v184
    %230 = vmatprep.subr.mxu0 %v187
    %231 = vmatpush1.msra.mxu0 %v186
    %232 = vmatprep.subr.mxu0 %v189
    %233 = vmatpush1.msra.mxu0 %v188
    %234 = vmatprep.subr.mxu0 %v191
    %235 = vmatpush1.msra.mxu0 %v190
    %236 = vmatprep.subr.mxu0 %v193
    %237 = vmatpush1.msra.mxu0 %v192
    %238 = vmatprep.subr.mxu0 %v195
    %239 = vmatpush1.msra.mxu0 %v194
    %240 = vmatprep.subr.mxu0 %v197
    %241 = vmatpush1.msra.mxu0 %v196
    %242 = vmatprep.subr.mxu0 0.0
    %243 = vmatpush1.msra.mxu0 0.0
    %244 = vmatprep.subr.mxu0 0.0
    %245 = vmatpush1.msra.mxu0 0.0
    %246 = vmatprep.subr.mxu0 0.0
    %247 = vmatpush1.msra.mxu0 0.0
    %248 = vmatprep.subr.mxu0 0.0
    %249 = vmatpush1.msra.mxu0 0.0
    %250 = vmatprep.subr.mxu0 0.0
    %251 = vmatpush1.msra.mxu0 0.0
    %252 = vmatprep.subr.mxu0 0.0
    %253 = vmatpush1.msra.mxu0 0.0
    %254 = vmatprep.subr.mxu0 0.0
    %255 = vmatpush1.msra.mxu0 0.0
    %256 = vmatprep.subr.mxu0 0.0
    %257 = vmatpush1.msra.mxu0 0.0
    %258 = vmatprep.subr.mxu0 0.0
    %259 = vmatpush1.msra.mxu0 0.0
    %260 = vmatprep.subr.mxu0 0.0
    %261 = vmatpush1.msra.mxu0 0.0
    %262 = vmatprep.subr.mxu0 0.0
    %263 = vmatpush1.msra.mxu0 0.0
    %264 = vmatprep.subr.mxu0 0.0
    %265 = vmatpush1.msra.mxu0 0.0
    %266 = vmatprep.subr.mxu0 0.0
    %267 = vmatpush1.msra.mxu0 0.0
    %268 = vmatprep.subr.mxu0 0.0
    %269 = vmatpush1.msra.mxu0 0.0
    %270 = vmatprep.subr.mxu0 0.0
    %271 = vmatpush1.msra.mxu0 0.0
    %272 = vmatprep.subr.mxu0 0.0
    %273 = vmatpush1.msra.mxu0 0.0
    %274 = vmatprep.mubr.f32.mxu0 0.0
    %275 = vmatmul.mubr.f32.gmra.mrb[0].mxu0 %v165
    %v276 = vpop.f32.mrb[0].mxu0
    %v277 = vadd.f32 %v203, %v276
    %v278 = vpop.f32.mrb[0].mxu0
    %v279 = vadd.f32 %v207, %v278
    %280 = vdwg.mxu0
    %v281 = vmax.f32 %v277, 0.0
    %v282 = vmax.f32 %v279, 0.0
    %v283 = vld [vmem:[%s1] sm:$0xf]
    %v284 = vld [vmem:[%s6] sm:$0xff]
    %v285 = vld [vmem:[%s6 + $0x8] sm:$0xff]
    %v286 = vld [vmem:[%s6 + $0x10] sm:$0xff]
    %v287 = vld [vmem:[%s6 + $0x18] sm:$0xff]
    %v288 = vld [vmem:[%s6 + $0x20] sm:$0xff]
    %v289 = vld [vmem:[%s6 + $0x28] sm:$0xff]
    %v290 = vld [vmem:[%s6 + $0x30] sm:$0xff]
    %v291 = vld [vmem:[%s6 + $0x38] sm:$0xff]
    %v292 = vld [vmem:[%s6 + $0x40] sm:$0xff]
    %v293 = vld [vmem:[%s6 + $0x48] sm:$0xff]
    %v294 = vld [vmem:[%s6 + $0x50] sm:$0xff]
    %v295 = vld [vmem:[%s6 + $0x58] sm:$0xff]
    %v296 = vld [vmem:[%s6 + $0x60] sm:$0xff]
    %v297 = vld [vmem:[%s6 + $0x68] sm:$0xff]
    %v298 = vld [vmem:[%s6 + $0x70] sm:$0xff]
    %v299 = vld [vmem:[%s6 + $0x78] sm:$0xff]
    %v300 = vld [vmem:[%s6 + $0x80] sm:$0xff]
    %v301 = vld [vmem:[%s6 + $0x88] sm:$0xff]
    %v302 = vld [vmem:[%s6 + $0x90] sm:$0xff]
    %v303 = vld [vmem:[%s6 + $0x98] sm:$0xff]
    %v304 = vld [vmem:[%s6 + $0xa0] sm:$0xff]
    %v305 = vld [vmem:[%s6 + $0xa8] sm:$0xff]
    %v306 = vld [vmem:[%s6 + $0xb0] sm:$0xff]
    %v307 = vld [vmem:[%s6 + $0xb8] sm:$0xff]
    %v308 = vld [vmem:[%s6 + $0xc0] sm:$0xff]
    %v309 = vld [vmem:[%s6 + $0xc8] sm:$0xff]
    %v310 = vld [vmem:[%s6 + $0xd0] sm:$0xff]
    %v311 = vld [vmem:[%s6 + $0xd8] sm:$0xff]
    %v312 = vld [vmem:[%s6 + $0xe0] sm:$0xff]
    %v313 = vld [vmem:[%s6 + $0xe8] sm:$0xff]
    %v314 = vld [vmem:[%s6 + $0xf0] sm:$0xff]
    %v315 = vld [vmem:[%s6 + $0xf8] sm:$0xff]
    %v316 = vld [vmem:[%s8] sm:$0x1]
    %v317 = vlaneseq
    %v318 = vshrl.u32 %v317, 7
    %v319 = vsub.s32 0, %v318
    %v320 = vrot.slane %v316, %v319
    %321 = vmatprep.subr.mxu0 0.0
    %322 = vmatpush1.msra.mxu0 %v284
    %323 = vmatprep.subr.mxu0 0.0
    %324 = vmatpush1.msra.mxu0 %v285
    %325 = vmatprep.subr.mxu0 0.0
    %326 = vmatpush1.msra.mxu0 %v286
    %327 = vmatprep.subr.mxu0 0.0
    %328 = vmatpush1.msra.mxu0 %v287
    %329 = vmatprep.subr.mxu0 0.0
    %330 = vmatpush1.msra.mxu0 %v288
    %331 = vmatprep.subr.mxu0 0.0
    %332 = vmatpush1.msra.mxu0 %v289
    %333 = vmatprep.subr.mxu0 0.0
    %334 = vmatpush1.msra.mxu0 %v290
    %335 = vmatprep.subr.mxu0 0.0
    %336 = vmatpush1.msra.mxu0 %v291
    %337 = vmatprep.subr.mxu0 0.0
    %338 = vmatpush1.msra.mxu0 %v292
    %339 = vmatprep.subr.mxu0 0.0
    %340 = vmatpush1.msra.mxu0 %v293
    %341 = vmatprep.subr.mxu0 0.0
    %342 = vmatpush1.msra.mxu0 %v294
    %343 = vmatprep.subr.mxu0 0.0
    %344 = vmatpush1.msra.mxu0 %v295
    %345 = vmatprep.subr.mxu0 0.0
    %346 = vmatpush1.msra.mxu0 %v296
    %347 = vmatprep.subr.mxu0 0.0
    %348 = vmatpush1.msra.mxu0 %v297
    %349 = vmatprep.subr.mxu0 0.0
    %350 = vmatpush1.msra.mxu0 %v298
    %351 = vmatprep.subr.mxu0 0.0
    %352 = vmatpush1.msra.mxu0 %v299
    %353 = vmatprep.subr.mxu0 0.0
    %354 = vmatpush1.msra.mxu0 %v300
    %355 = vmatprep.subr.mxu0 0.0
    %356 = vmatpush1.msra.mxu0 %v301
    %357 = vmatprep.subr.mxu0 0.0
    %358 = vmatpush1.msra.mxu0 %v302
    %359 = vmatprep.subr.mxu0 0.0
    %360 = vmatpush1.msra.mxu0 %v303
    %361 = vmatprep.subr.mxu0 0.0
    %362 = vmatpush1.msra.mxu0 %v304
    %363 = vmatprep.subr.mxu0 0.0
    %364 = vmatpush1.msra.mxu0 %v305
    %365 = vmatprep.subr.mxu0 0.0
    %366 = vmatpush1.msra.mxu0 %v306
    %367 = vmatprep.subr.mxu0 0.0
    %368 = vmatpush1.msra.mxu0 %v307
    %369 = vmatprep.subr.mxu0 0.0
    %370 = vmatpush1.msra.mxu0 %v308
    %371 = vmatprep.subr.mxu0 0.0
    %372 = vmatpush1.msra.mxu0 %v309
    %373 = vmatprep.subr.mxu0 0.0
    %374 = vmatpush1.msra.mxu0 %v310
    %375 = vmatprep.subr.mxu0 0.0
    %376 = vmatpush1.msra.mxu0 %v311
    %377 = vmatprep.subr.mxu0 0.0
    %378 = vmatpush1.msra.mxu0 %v312
    %379 = vmatprep.subr.mxu0 0.0
    %380 = vmatpush1.msra.mxu0 %v313
    %381 = vmatprep.subr.mxu0 0.0
    %382 = vmatpush1.msra.mxu0 %v314
    %383 = vmatprep.subr.mxu0 0.0
    %384 = vmatpush1.msra.mxu0 %v315
    %385 = vmatprep.mubr.f32.mxu0 %v282
    %386 = vmatmul.mubr.f32.gmra.mrb[0].mxu0 %v281
    %v387 = vpop.f32.mrb[0].mxu0
    %v388 = vadd.f32 %v320, %v387
    %v389 = vpop.f32.mrb[0].mxu0
    %390 = vdwg.mxu0
    %v391 = vld [vmem:[%s7] sm:$0xff]
    %v392 = vld [vmem:[%s7 + $0x8] sm:$0xff]
    %v393 = vld [vmem:[%s7 + $0x10] sm:$0xff]
    %v394 = vld [vmem:[%s7 + $0x18] sm:$0xff]
    %v395 = vld [vmem:[%s8 + $0x1] sm:$0x1]
    %v396 = vlaneseq
    %v397 = vshrl.u32 %v396, 7
    %v398 = vsub.s32 0, %v397
    %v399 = vrot.slane %v395, %v398
    %vm400 = vcmask 261120
    %v402 = vsel %vm400, %v283, 0
    %404 = vmatprep.subr.mxu0 0.0
    %405 = vmatpush1.msra.mxu0 %v391
    %406 = vmatprep.subr.mxu0 0.0
    %407 = vmatpush1.msra.mxu0 %v392
    %408 = vmatprep.subr.mxu0 0.0
    %409 = vmatpush1.msra.mxu0 %v393
    %410 = vmatprep.subr.mxu0 0.0
    %411 = vmatpush1.msra.mxu0 %v394
    %412 = vmatprep.subr.mxu0 0.0
    %413 = vmatpush1.msra.mxu0 0.0
    %414 = vmatprep.subr.mxu0 0.0
    %415 = vmatpush1.msra.mxu0 0.0
    %416 = vmatprep.subr.mxu0 0.0
    %417 = vmatpush1.msra.mxu0 0.0
    %418 = vmatprep.subr.mxu0 0.0
    %419 = vmatpush1.msra.mxu0 0.0
    %420 = vmatprep.subr.mxu0 0.0
    %421 = vmatpush1.msra.mxu0 0.0
    %422 = vmatprep.subr.mxu0 0.0
    %423 = vmatpush1.msra.mxu0 0.0
    %424 = vmatprep.subr.mxu0 0.0
    %425 = vmatpush1.msra.mxu0 0.0
    %426 = vmatprep.subr.mxu0 0.0
    %427 = vmatpush1.msra.mxu0 0.0
    %428 = vmatprep.subr.mxu0 0.0
    %429 = vmatpush1.msra.mxu0 0.0
    %430 = vmatprep.subr.mxu0 0.0
    %431 = vmatpush1.msra.mxu0 0.0
    %432 = vmatprep.subr.mxu0 0.0
    %433 = vmatpush1.msra.mxu0 0.0
    %434 = vmatprep.subr.mxu0 0.0
    %435 = vmatpush1.msra.mxu0 0.0
    %436 = vmatprep.subr.mxu0 0.0
    %437 = vmatpush1.msra.mxu0 0.0
    %438 = vmatprep.subr.mxu0 0.0
    %439 = vmatpush1.msra.mxu0 0.0
    %440 = vmatprep.subr.mxu0 0.0
    %441 = vmatpush1.msra.mxu0 0.0
    %442 = vmatprep.subr.mxu0 0.0
    %443 = vmatpush1.msra.mxu0 0.0
    %444 = vmatprep.subr.mxu0 0.0
    %445 = vmatpush1.msra.mxu0 0.0
    %446 = vmatprep.subr.mxu0 0.0
    %447 = vmatpush1.msra.mxu0 0.0
    %448 = vmatprep.subr.mxu0 0.0
    %449 = vmatpush1.msra.mxu0 0.0
    %450 = vmatprep.subr.mxu0 0.0
    %451 = vmatpush1.msra.mxu0 0.0
    %452 = vmatprep.subr.mxu0 0.0
    %453 = vmatpush1.msra.mxu0 0.0
    %454 = vmatprep.subr.mxu0 0.0
    %455 = vmatpush1.msra.mxu0 0.0
    %456 = vmatprep.subr.mxu0 0.0
    %457 = vmatpush1.msra.mxu0 0.0
    %458 = vmatprep.subr.mxu0 0.0
    %459 = vmatpush1.msra.mxu0 0.0
    %460 = vmatprep.subr.mxu0 0.0
    %461 = vmatpush1.msra.mxu0 0.0
    %462 = vmatprep.subr.mxu0 0.0
    %463 = vmatpush1.msra.mxu0 0.0
    %464 = vmatprep.subr.mxu0 0.0
    %465 = vmatpush1.msra.mxu0 0.0
    %466 = vmatprep.subr.mxu0 0.0
    %467 = vmatpush1.msra.mxu0 0.0
    %468 = vmatprep.mubr.f32.mxu0 0.0
    %469 = vmatmul.mubr.f32.gmra.mrb[0].mxu0 %v402
    %v470 = vpop.f32.mrb[0].mxu0
    %v471 = vadd.f32 %v399, %v470
    %v472 = vpop.f32.mrb[0].mxu0
    %473 = vdwg.mxu0
    %v474 = vadd.f32 %v388, %v471
    %v475 = vxor.u32 %v474, 2147483648
    %v476 = vmul.f32 %v475, 1.442695
    %v477 = vpow.pop %v476
    %v478 = vadd.f32 %v477, 1.0
    %v479 = vrcp.pop %v478
    %v480 = vmul.f32 1.0, %v479
    %482 = vrot.lane.b32.xlu0 %v471, 64
    %v483 = vpop.permute.xlu0 %482
    %v485 = vmul.f32 %v480, %v483
    %487 = vrot.lane.b32.xlu0 %v485, 64
    %v488 = vpop.permute.xlu0 %487
    %v490 = vadd.f32 %v388, %v488
    %v491 = vtanh.pop %v490
    %v492 = vsub.f32 1.0, %v480
    %494 = vrot.lane.b32.xlu0 %v491, 96
    %v495 = vpop.permute.xlu0 %494
    %v497 = vmul.f32 %v492, %v495
    %498 = vrot.lane.b32.xlu0 %v283, 32
    %v499 = vpop.permute.xlu0 %498
    %v501 = vmul.f32 %v480, %v499
    %v502 = vadd.f32 %v497, %v501
    %v503 = vld [vmem:[%s9] sm:$0xff]
    %v504 = vld [vmem:[%s9 + $0x8] sm:$0xff]
    %v505 = vld [vmem:[%s9 + $0x10] sm:$0xff]
    %v506 = vld [vmem:[%s9 + $0x18] sm:$0xff]
    %v507 = vld [vmem:[%s10] sm:$0x1]
    %v509 = vlaneseq
    %v510 = vshrl.u32 %v509, 7
    %v511 = vsub.s32 0, %v510
    %v512 = vrot.slane %v507, %v511
    %515 = vrot.lane.b32.xlu0 %v502, 96
    %v516 = vpop.permute.xlu0 %515
    %v517 = vsel %vm400, %v516, 0
    %519 = vmatprep.subr.mxu0 0.0
    %520 = vmatpush1.msra.mxu0 %v503
    %521 = vmatprep.subr.mxu0 0.0
    %522 = vmatpush1.msra.mxu0 %v504
    %523 = vmatprep.subr.mxu0 0.0
    %524 = vmatpush1.msra.mxu0 %v505
    %525 = vmatprep.subr.mxu0 0.0
    %526 = vmatpush1.msra.mxu0 %v506
    %527 = vmatprep.subr.mxu0 0.0
    %528 = vmatpush1.msra.mxu0 0.0
    %529 = vmatprep.subr.mxu0 0.0
    %530 = vmatpush1.msra.mxu0 0.0
    %531 = vmatprep.subr.mxu0 0.0
    %532 = vmatpush1.msra.mxu0 0.0
    %533 = vmatprep.subr.mxu0 0.0
    %534 = vmatpush1.msra.mxu0 0.0
    %535 = vmatprep.subr.mxu0 0.0
    %536 = vmatpush1.msra.mxu0 0.0
    %537 = vmatprep.subr.mxu0 0.0
    %538 = vmatpush1.msra.mxu0 0.0
    %539 = vmatprep.subr.mxu0 0.0
    %540 = vmatpush1.msra.mxu0 0.0
    %541 = vmatprep.subr.mxu0 0.0
    %542 = vmatpush1.msra.mxu0 0.0
    %543 = vmatprep.subr.mxu0 0.0
    %544 = vmatpush1.msra.mxu0 0.0
    %545 = vmatprep.subr.mxu0 0.0
    %546 = vmatpush1.msra.mxu0 0.0
    %547 = vmatprep.subr.mxu0 0.0
    %548 = vmatpush1.msra.mxu0 0.0
    %549 = vmatprep.subr.mxu0 0.0
    %550 = vmatpush1.msra.mxu0 0.0
    %551 = vmatprep.subr.mxu0 0.0
    %552 = vmatpush1.msra.mxu0 0.0
    %553 = vmatprep.subr.mxu0 0.0
    %554 = vmatpush1.msra.mxu0 0.0
    %555 = vmatprep.subr.mxu0 0.0
    %556 = vmatpush1.msra.mxu0 0.0
    %557 = vmatprep.subr.mxu0 0.0
    %558 = vmatpush1.msra.mxu0 0.0
    %559 = vmatprep.subr.mxu0 0.0
    %560 = vmatpush1.msra.mxu0 0.0
    %561 = vmatprep.subr.mxu0 0.0
    %562 = vmatpush1.msra.mxu0 0.0
    %563 = vmatprep.subr.mxu0 0.0
    %564 = vmatpush1.msra.mxu0 0.0
    %565 = vmatprep.subr.mxu0 0.0
    %566 = vmatpush1.msra.mxu0 0.0
    %567 = vmatprep.subr.mxu0 0.0
    %568 = vmatpush1.msra.mxu0 0.0
    %569 = vmatprep.subr.mxu0 0.0
    %570 = vmatpush1.msra.mxu0 0.0
    %571 = vmatprep.subr.mxu0 0.0
    %572 = vmatpush1.msra.mxu0 0.0
    %573 = vmatprep.subr.mxu0 0.0
    %574 = vmatpush1.msra.mxu0 0.0
    %575 = vmatprep.subr.mxu0 0.0
    %576 = vmatpush1.msra.mxu0 0.0
    %577 = vmatprep.subr.mxu0 0.0
    %578 = vmatpush1.msra.mxu0 0.0
    %579 = vmatprep.subr.mxu0 0.0
    %580 = vmatpush1.msra.mxu0 0.0
    %581 = vmatprep.subr.mxu0 0.0
    %582 = vmatpush1.msra.mxu0 0.0
    %583 = vmatprep.mubr.f32.mxu0 0.0
    %584 = vmatmul.mubr.f32.gmra.mrb[0].mxu0 %v517
    %v585 = vpop.f32.mrb[0].mxu0
    %v586 = vadd.f32 %v512, %v585
    %v587 = vpop.f32.mrb[0].mxu0
    %588 = vdwg.mxu0
    %589 = vst [vmem:[%s11] sm:$0xf] %v586
    // Predicated region
    $region50: #{ray_encoder_forward.1} parent=1 // pred_check
      _
    $region51: #{ray_encoder_forward.1} parent=1 // pred_check_branch
      %591 = sbr.rel (0) target = $region53
    $region52: #{ray_encoder_forward.1} parent=1 // pred_region
      _
    $region53: #{ray_encoder_forward.1} parent=1 // pred_fallthru
      _
    // Predicated region
    $region54: #{ray_encoder_forward.1} parent=1 // pred_check
      _
    $region55: #{ray_encoder_forward.1} parent=1 // pred_check_branch
      %593 = sbr.rel (0) target = $region57
    $region56: #{ray_encoder_forward.1} parent=1 // pred_region
      _
    $region57: #{ray_encoder_forward.1} parent=1 // pred_fallthru
      _
    %594 = vsyncpa [#allocation3], 1

</llo_original>
